<compile_context>
chip_gen: v5e
topology: v5e:2x2
jax: 0.10.0
libtpu: 0.0.40
codegen_flags: <defaults>
</compile_context>

<pallas_src>
import jax
import jax.numpy as jnp
from jax.experimental import pallas as pl
from jax.experimental.pallas import tpu as pltpu

LANE = 128                       # TPU vreg lane width
T_TILE_CAP = 4096                # keep many grid steps for megacore / pipelining
VMEM_TILE_BUDGET = 32 * 1024 * 1024   # bytes for double-buffered x + out tiles
VMEM_LIMIT_BYTES = 48 * 1024 * 1024   # scoped VMEM limit (safe on v5e/v6e/v7x)


def nconv_kernel(x_ref, a_ref, o_ref):
    # x_ref: (V, T_tile)   a_ref: (W, V)   o_ref: (W, T_tile)
    acc = jnp.dot(a_ref[...], x_ref[...],
                  preferred_element_type=jnp.float32)      # (W, T_tile) on MXU
    o_ref[...] = acc.astype(o_ref.dtype)


def nconv(x, A):
    """x: (N, C, V, L), A: (W, V)  ->  (N, C, W, L).

    out[n, c, w, l] = sum_v x[n, c, v, l] * A[w, v]
    (matches torch.einsum('ncvl,vw->ncwl', x, A.transpose(-1, -2)))
    """
    N, C, V, L = x.shape
    W, V2 = A.shape
    assert V == V2, "A contraction dim must match x node dim"

    # Lane-dense layout: contraction dim V on sublanes, everything else on lanes.
    T_total = N * C * L
    x2d = jnp.transpose(x, (2, 0, 1, 3)).reshape(V, T_total)   # (V, N*C*L)

    # Tile size along T: largest multiple of 128 whose double-buffered
    # in/out tiles fit the VMEM budget, capped, and no bigger than needed.
    elt = x.dtype.itemsize
    per_col = 2 * (V + W) * elt                                # dbl-buffered bytes / column
    t_fit = max(LANE, (VMEM_TILE_BUDGET // per_col) // LANE * LANE)
    T_tile = min(T_TILE_CAP, t_fit, pl.cdiv(T_total, LANE) * LANE)

    # Pad T so the grid tiles it exactly (padded columns are sliced off after).
    T_pad = pl.cdiv(T_total, T_tile) * T_tile
    if T_pad != T_total:
        x2d = jnp.pad(x2d, ((0, 0), (0, T_pad - T_total)))

    grid = (T_pad // T_tile,)

    out2d = pl.pallas_call(
        nconv_kernel,
        out_shape=jax.ShapeDtypeStruct((W, T_pad), x.dtype),
        grid_spec=pltpu.PrefetchScalarGridSpec(
            num_scalar_prefetch=0,
            grid=grid,
            in_specs=[
                pl.BlockSpec((V, T_tile), lambda t: (0, t)),   # big lane-dense x tile
                pl.BlockSpec((W, V), lambda t: (0, 0)),        # A resident every step
            ],
            out_specs=pl.BlockSpec((W, T_tile), lambda t: (0, t)),
        ),
        compiler_params=pltpu.CompilerParams(
            dimension_semantics=("parallel",),
            vmem_limit_bytes=VMEM_LIMIT_BYTES,
        ),
    )(x2d, A)

    out2d = out2d[:, :T_total]
    return jnp.transpose(out2d.reshape(W, N, C, L), (1, 2, 0, 3))


if __name__ == "__main__":
    key = jax.random.PRNGKey(0)
    kx, ka = jax.random.split(key)

    # small shapes consistent with 'ncvl': batch=2, channels=4, nodes=8, seq=16
    N, C, V, L = 2, 4, 8, 16
    x = jax.random.normal(kx, (N, C, V, L), dtype=jnp.float32)
    A = jax.random.normal(ka, (V, V), dtype=jnp.float32)   # adjacency (W, V), W == V

    out = jax.block_until_ready(nconv(x, A))

    # reference of the PyTorch forward: einsum('ncvl,vw->ncwl', x, A.T)
    ref = jnp.einsum('ncvl,wv->ncwl', x, A)
    assert out.shape == ref.shape == (N, C, V, L)
    assert jnp.allclose(out, ref, atol=1e-5, rtol=1e-5)
    print("KERNEL_OK")
</pallas_src>

<mosaic_0001>
module attributes {stable_mosaic.version = 11 : i64} {
  func.func @nconv_kernel(%arg0: i32, %arg1: memref<8x128xf32, #tpu.memory_space<vmem>>, %arg2: memref<8x8xf32, #tpu.memory_space<vmem>>, %arg3: memref<8x128xf32, #tpu.memory_space<vmem>>) attributes {dimension_semantics = [#tpu.dimension_semantics<parallel>], iteration_bounds = array<i64: 1>, scalar_prefetch = 0 : i64, scratch_operands = 0 : i64, tpu.core_type = #tpu.core_type<tc>, window_params = [{transform_indices = @transform_0, window_bounds = array<i64: 8, 128>}, {pipeline_mode = #tpu.pipeline_mode<synchronous>, transform_indices = @transform_1, window_bounds = array<i64: 8, 8>}, {transform_indices = @transform_2, window_bounds = array<i64: 8, 128>}]} {
    %c0 = arith.constant 0 : index
    %c0_0 = arith.constant 0 : index
    %0 = vector.load %arg2[%c0, %c0_0] : memref<8x8xf32, #tpu.memory_space<vmem>>, vector<8x8xf32>
    %c0_1 = arith.constant 0 : index
    %c0_2 = arith.constant 0 : index
    %1 = vector.load %arg1[%c0_1, %c0_2] : memref<8x128xf32, #tpu.memory_space<vmem>>, vector<8x128xf32>
    %cst = arith.constant dense<0.000000e+00> : vector<8x128xf32>
    %2 = tpu.matmul %0, %1, %cst {dimension_numbers = #tpu.dot_dimension_numbers<[1], [0], [0], [1], [0, 0, 1, 1], [], []>} : vector<8x8xf32>, vector<8x128xf32>, vector<8x128xf32> -> vector<8x128xf32>
    %c0_3 = arith.constant 0 : index
    %c0_4 = arith.constant 0 : index
    %3 = vector.load %arg3[%c0_3, %c0_4] : memref<8x128xf32, #tpu.memory_space<vmem>>, vector<8x128xf32>
    tpu.vector_store %arg3[%c0_3, %c0_4], %2 {strides = array<i32>} : memref<8x128xf32, #tpu.memory_space<vmem>>, vector<8x128xf32>,
    return
  }
  func.func @transform_0(%arg0: i32) -> (i32, i32) {
    %c0_i32 = arith.constant 0 : i32
    %c0_i32_0 = arith.constant 0 : i32
    return %c0_i32, %arg0 : i32, i32
  }
  func.func @transform_1(%arg0: i32) -> (i32, i32) {
    %c0_i32 = arith.constant 0 : i32
    %c0_i32_0 = arith.constant 0 : i32
    %c0_i32_1 = arith.constant 0 : i32
    return %c0_i32, %c0_i32_0 : i32, i32
  }
  func.func @transform_2(%arg0: i32) -> (i32, i32) {
    %c0_i32 = arith.constant 0 : i32
    %c0_i32_0 = arith.constant 0 : i32
    return %c0_i32, %arg0 : i32, i32
  }
}

</mosaic_0001>

<llo_original>
// kernel: tpu_custom_call.1
$region0: #{tpu_custom_call.1}
  #allocation0 [shape = 'u32[]', space=smem, size = 0x4, offset = 0x4, fixed_abs, tag = 'smem constant byte address 0x4 - core index']
  #allocation1 [shape = 'u32[72,128]{1,0:T(1,128)}', space=vmem, size = 0x9000, scoped, tag = 'internal scratch']
  %s0 = inlined_call_operand.hbm [shape: f32[8,128], index: 0, kind: input, shape index: {}]
  %s1 = inlined_call_operand.hbm [shape: f32[8,8], index: 1, kind: input, shape index: {}]
  %s2 = inlined_call_operand.hbm [shape: f32[8,128], index: 2, kind: output, shape index: {}]
  %s3 = sld [smem:[#allocation0]]
  $region26: #{tpu_custom_call.1} parent=0
    _
  %s5 = ssub.s32 1, %s3
  %s6 = scalar_select 0, %s5, %s3
  $region1: #{tpu_custom_call.1} parent=0
    #allocation2 [shape = 'u8[4096]{0}', space=vmem, size = 0x1000, scoped, tag = 'input window, operand 0, single buffered']
    #allocation3 [shape = 's32[1]{0}', space=sflag, size = 0x4, scoped, tag = 'scoped memory for tpu_custom_call.1']
    #allocation4 [shape = 's32[1]{0}', space=sflag, size = 0x4, scoped, tag = 'scoped memory for tpu_custom_call.1']
    #allocation5 [shape = 'u8[4096]{0}', space=vmem, size = 0x1000, scoped, tag = 'input window, operand 1, single buffered']
    #allocation6 [shape = 's32[1]{0}', space=sflag, size = 0x4, scoped, tag = 'scoped memory for tpu_custom_call.1']
    #allocation7 [shape = 'u8[4096]{0}', space=vmem, size = 0x1000, scoped, tag = 'output window, operand 0, single buffered']
    %7 = vsyncpa [#allocation3], 0
    %8 = vsyncpa [#allocation6], 0
    %9 = vsyncpa [#allocation4], 0
    // Predicated region
    $region2: #{tpu_custom_call.1} parent=1 // pred_check
      _
    $region3: #{tpu_custom_call.1} parent=1 // pred_check_branch
      %11 = sbr.rel (0) target = $region5
    $region4: #{tpu_custom_call.1} parent=1 // pred_region
      %13 = vsyncadd [#allocation3], 0
      %s15 = sshll.u32 %s0, 4
      %s16 = int_to_ptr.hbm [resolvable:$true] %s15
      %s17 = sshll.u32 [#allocation2], 4
      %s18 = int_to_ptr.vmem [resolvable:$true] %s17
      %20 = dma.hbm_to_vmem [thread:$0]  %s16, 128, %s18, [#allocation3]
    $region5: #{tpu_custom_call.1} parent=1 // pred_fallthru
      _
    // Predicated region
    $region6: #{tpu_custom_call.1} parent=1 // pred_check
      _
    $region7: #{tpu_custom_call.1} parent=1 // pred_check_branch
      %22 = sbr.rel (0) target = $region9
    $region8: #{tpu_custom_call.1} parent=1 // pred_region
      %24 = vsyncadd [#allocation6], 0
      %s26 = sshll.u32 %s1, 4
      %s27 = int_to_ptr.hbm [resolvable:$true] %s26
      %s28 = sshll.u32 [#allocation5], 4
      %s29 = int_to_ptr.vmem [resolvable:$true] %s28
      %31 = dma.hbm_to_vmem [thread:$0]  %s27, 128, %s29, [#allocation6]
    $region9: #{tpu_custom_call.1} parent=1 // pred_fallthru
      _
    // Predicated region
    $region10: #{tpu_custom_call.1} parent=1 // pred_check
      _
    $region11: #{tpu_custom_call.1} parent=1 // pred_check_branch
      %33 = sbr.rel (0) target = $region13
    $region12: #{tpu_custom_call.1} parent=1 // pred_region
      %35 = dma.done [#allocation3], 128
    $region13: #{tpu_custom_call.1} parent=1 // pred_fallthru
      _
    // Predicated region
    $region14: #{tpu_custom_call.1} parent=1 // pred_check
      _
    $region15: #{tpu_custom_call.1} parent=1 // pred_check_branch
      %37 = sbr.rel (0) target = $region17
    $region16: #{tpu_custom_call.1} parent=1 // pred_region
      %39 = dma.done [#allocation6], 128
    $region17: #{tpu_custom_call.1} parent=1 // pred_fallthru
      _
    %v40 = vld [vmem:[#allocation5] sm:$0xff]
    %v41 = vld [vmem:[#allocation2] sm:$0xff]
    %vm42 = vcmask 64512
    %v44 = vsel %vm42, %v40, 0
    %46 = vmatpush.msra.mxu0 0.0
    %47 = vmatpush.msra.mxu0 0.0
    %48 = vmatpush.msra.mxu0 0.0
    %49 = vmatpush.msra.mxu0 0.0
    %50 = vmatpush.msra.mxu0 0.0
    %51 = vmatpush.msra.mxu0 0.0
    %52 = vmatpush.msra.mxu0 0.0
    %53 = vmatpush.msra.mxu0 0.0
    %54 = vmatpush.msra.mxu0 0.0
    %55 = vmatpush.msra.mxu0 0.0
    %56 = vmatpush.msra.mxu0 0.0
    %57 = vmatpush.msra.mxu0 0.0
    %58 = vmatpush.msra.mxu0 0.0
    %59 = vmatpush.msra.mxu0 0.0
    %60 = vmatpush.msra.mxu0 0.0
    %61 = vmatpush.msra.mxu0 %v41
    %62 = vmatmul.f32.gmra.mxu0 %v44
    %v63 = vpop.f32.mrf.mxu0
    %v64 = vadd.f32 0.0, %v63
    %65 = vdwg.mxu0
    %66 = vst [vmem:[#allocation7] sm:$0xff] %v64
    // Predicated region
    $region18: #{tpu_custom_call.1} parent=1 // pred_check
      _
    $region19: #{tpu_custom_call.1} parent=1 // pred_check_branch
      %68 = sbr.rel (0) target = $region21
    $region20: #{tpu_custom_call.1} parent=1 // pred_region
      %70 = vsyncadd [#allocation4], 0
      %s72 = sshll.u32 [#allocation7], 4
      %s73 = int_to_ptr.vmem [resolvable:$true] %s72
      %s74 = sshll.u32 %s2, 4
      %s75 = int_to_ptr.hbm [resolvable:$true] %s74
      %77 = dma.vmem_to_hbm [thread:$0]  %s73, 128, %s75, [#allocation4]
    $region21: #{tpu_custom_call.1} parent=1 // pred_fallthru
      _
    // Predicated region
    $region22: #{tpu_custom_call.1} parent=1 // pred_check
      _
    $region23: #{tpu_custom_call.1} parent=1 // pred_check_branch
      %79 = sbr.rel (0) target = $region25
    $region24: #{tpu_custom_call.1} parent=1 // pred_region
      %81 = dma.done [#allocation4], 128
    $region25: #{tpu_custom_call.1} parent=1 // pred_fallthru
      _
    %82 = vsyncpa [#allocation3], 1
    %83 = vsyncpa [#allocation6], 1
    %84 = vsyncpa [#allocation4], 1

</llo_original>
